<compile_context>
chip_gen: v6e
topology: v6e:2x2x1
jax: 0.10.0
libtpu: 0.0.40
codegen_flags: <defaults>
</compile_context>

<pallas_src>
import functools

import jax
import jax.numpy as jnp
from jax.experimental import pallas as pl
from jax.experimental.pallas import tpu as pltpu

D_IN, H1, H2, D_OUT = 784, 256, 128, 10
D_OUT_PAD = 128    # lane-dense output width (avoids masked 10-lane stores)


def _round_up(x, m):
    return ((x + m - 1) // m) * m


@functools.lru_cache(maxsize=None)
def _num_tensorcores_per_chip():
    """TensorCores per chip: v7x has 2, v5e/v6e have 1 (used only for grid shaping)."""
    try:
        kind = jax.devices()[0].device_kind.lower()
    except Exception:
        return 1
    return 2 if ("v7" in kind or "7x" in kind) else 1


def _choose_batch_tile(batch, block_b, num_tc):
    """Pick the batch tile (rows per grid step)."""
    block_b = max(8, (block_b // 8) * 8)          # keep tiles a multiple of 8 rows
    if num_tc >= 2 and batch >= 16:
        # v7x: keep >= 2 (ideally 4) grid programs so both TensorCores get work.
        target = 4 if batch >= 32 else 2
        return min(block_b, max(8, _round_up(-(-batch // target), 8)))
    if batch <= block_b:
        # Single-TC chips (v5e/v6e), or tiny batches: one tile covering the whole
        # batch — zero grid-loop overhead and no partial blocks (a block equal to
        # the full array dim is exempt from the (8,128) divisibility rule).
        return batch
    return block_b


def _mlp_kernel(x_ref, w1_ref, b1_ref, w2_ref, b2_ref, w3_ref, b3_ref, o_ref):
    # Fused 3-layer MLP on one batch tile. Weights (bf16) are VMEM-resident across
    # all batch tiles (constant index_maps); MXU accumulates in f32; biases f32.
    # f32 -> bf16 cast of x done here (VPU), not in a separate wrapper pass.
    x = x_ref[...].astype(jnp.bfloat16)
    h1 = jnp.dot(x, w1_ref[...], preferred_element_type=jnp.float32) + b1_ref[...]
    h1 = jnp.maximum(h1, 0.0).astype(jnp.bfloat16)
    h2 = jnp.dot(h1, w2_ref[...], preferred_element_type=jnp.float32) + b2_ref[...]
    h2 = jnp.maximum(h2, 0.0).astype(jnp.bfloat16)
    out = jnp.dot(h2, w3_ref[...], preferred_element_type=jnp.float32) + b3_ref[...]
    o_ref[...] = out.astype(o_ref.dtype)


def prepare_params(w1, b1, w2, b2, w3, b3):
    """One-time conversion (outside the hot path) of PyTorch-layout params.

    (out, in) f32 weights -> (in, out) bf16; only W3/b3 are padded (10 -> 128 wide)
    so the final matmul/store stay lane-dense.  Biases stay f32 for the bias add.
    """
    w1t = w1.T.astype(jnp.bfloat16)                         # (784, 256)
    w2t = w2.T.astype(jnp.bfloat16)                         # (256, 128)
    w3t = jnp.zeros((H2, D_OUT_PAD), jnp.bfloat16).at[:, :D_OUT].set(
        w3.T.astype(jnp.bfloat16))                          # (128, 128)
    b1r = b1[None, :].astype(jnp.float32)
    b2r = b2[None, :].astype(jnp.float32)
    b3r = jnp.zeros((1, D_OUT_PAD), jnp.float32).at[:, :D_OUT].set(
        b3.astype(jnp.float32))
    return w1t, b1r, w2t, b2r, w3t, b3r


@functools.partial(jax.jit, static_argnames=("block_b",))
def simple_mlp_forward(x, w1t, b1r, w2t, b2r, w3t, b3r, *, block_b=1024):
    """x: (B, 1, 28, 28) or (B, 784) f32; params from prepare_params(). Returns (B, 10) f32."""
    batch = x.shape[0]
    x2d = x.reshape(batch, -1)          # flatten only; NO cast / pad in the wrapper
    assert x2d.shape[1] == D_IN

    bb = _choose_batch_tile(batch, block_b, _num_tensorcores_per_chip())
    grid = (pl.cdiv(batch, bb),)        # ragged last tile: OOB rows read garbage
                                        # (row-local) and their writes are dropped.

    flops = 2 * batch * (D_IN * H1 + H1 * H2 + H2 * D_OUT_PAD)
    bytes_accessed = (
        batch * D_IN * 4                                    # x (f32, streamed)
        + (D_IN * H1 + H1 * H2 + H2 * D_OUT_PAD) * 2        # weights (bf16, resident)
        + (H1 + H2 + D_OUT_PAD) * 4                         # biases (f32)
        + batch * D_OUT_PAD * 2                             # output (bf16)
    )

    out_pad = pl.pallas_call(
        _mlp_kernel,
        out_shape=jax.ShapeDtypeStruct((batch, D_OUT_PAD), jnp.bfloat16),
        grid_spec=pltpu.PrefetchScalarGridSpec(
            num_scalar_prefetch=0,
            grid=grid,
            in_specs=[
                # activations: tiled over batch; last dim 784 = full array dim
                # (exempt from the 128 rule), Mosaic masks the ragged K internally.
                pl.BlockSpec((bb, D_IN), lambda i: (i, 0)),
                # weights / biases: full blocks, resident across all batch tiles
                pl.BlockSpec((D_IN, H1), lambda i: (0, 0)),
                pl.BlockSpec((1, H1), lambda i: (0, 0)),
                pl.BlockSpec((H1, H2), lambda i: (0, 0)),
                pl.BlockSpec((1, H2), lambda i: (0, 0)),
                pl.BlockSpec((H2, D_OUT_PAD), lambda i: (0, 0)),
                pl.BlockSpec((1, D_OUT_PAD), lambda i: (0, 0)),
            ],
            out_specs=pl.BlockSpec((bb, D_OUT_PAD), lambda i: (i, 0)),
        ),
        # NOTE: on v7x, verify in a trace that "parallel" shards the 1-D grid over
        # both TensorCores; if not, switch to pltpu.CORE_PARALLEL / pl.core_map.
        compiler_params=pltpu.CompilerParams(
            dimension_semantics=("parallel",),
        ),
        cost_estimate=pl.CostEstimate(
            flops=flops, transcendentals=0, bytes_accessed=bytes_accessed),
    )(x2d, w1t, b1r, w2t, b2r, w3t, b3r)

    # Tiny slice + upcast; bf16 logits keep the writeback stream lane-dense & half-size.
    return out_pad[:, :D_OUT].astype(jnp.float32)


def _init_params(key):
    """Deterministic synthetic parameters with PyTorch nn.Linear shapes."""
    ks = jax.random.split(key, 6)

    def uniform(k, shape, fan_in):
        bound = 1.0 / jnp.sqrt(fan_in)
        return jax.random.uniform(k, shape, jnp.float32, -bound, bound)

    w1 = uniform(ks[0], (H1, D_IN), D_IN)   # (256, 784)
    b1 = uniform(ks[1], (H1,), D_IN)
    w2 = uniform(ks[2], (H2, H1), H1)       # (128, 256)
    b2 = uniform(ks[3], (H2,), H1)
    w3 = uniform(ks[4], (D_OUT, H2), H2)    # (10, 128)
    b3 = uniform(ks[5], (D_OUT,), H2)
    return w1, b1, w2, b2, w3, b3


def _reference(x, w1, b1, w2, b2, w3, b3):
    x2d = x.reshape(x.shape[0], -1)
    h1 = jnp.maximum(x2d @ w1.T + b1, 0.0)
    h2 = jnp.maximum(h1 @ w2.T + b2, 0.0)
    return h2 @ w3.T + b3


if __name__ == "__main__":
    key = jax.random.PRNGKey(0)
    k_x, k_p = jax.random.split(key)

    params = _init_params(k_p)
    prepped = prepare_params(*params)   # one-time, outside the hot path

    ok = True
    # batch=8: exact single tile; batch=3: tiny/odd batch (full-dim block, no pad);
    # batch=20 with block_b=16: multi-step grid with a ragged last tile.
    for batch, block_b in ((8, 1024), (3, 1024), (20, 16)):
        x = jax.random.normal(k_x, (batch, 1, 28, 28), jnp.float32)  # MNIST-like NCHW
        out = jax.block_until_ready(simple_mlp_forward(x, *prepped, block_b=block_b))
        ref = _reference(x, *params)
        ok &= out.shape == (batch, D_OUT)
        # bf16 inputs/weights/logits with f32 MXU accumulation -> loosened tolerance
        # vs. the f32 reference (document for downstream LRP/XAI consumers).
        ok &= bool(jnp.allclose(out, ref, atol=5e-2, rtol=5e-2))

    assert ok
    print("KERNEL_OK")
</pallas_src>

<mosaic_0001>
module attributes {stable_mosaic.version = 11 : i64} {
  func.func @_mlp_kernel(%arg0: i32, %arg1: memref<8x784xf32, #tpu.memory_space<vmem>>, %arg2: memref<784x256xbf16, #tpu.memory_space<vmem>>, %arg3: memref<1x256xf32, #tpu.memory_space<vmem>>, %arg4: memref<256x128xbf16, #tpu.memory_space<vmem>>, %arg5: memref<1x128xf32, #tpu.memory_space<vmem>>, %arg6: memref<128x128xbf16, #tpu.memory_space<vmem>>, %arg7: memref<1x128xf32, #tpu.memory_space<vmem>>, %arg8: memref<8x128xbf16, #tpu.memory_space<vmem>>) attributes {dimension_semantics = [#tpu.dimension_semantics<parallel>], iteration_bounds = array<i64: 1>, scalar_prefetch = 0 : i64, scratch_operands = 0 : i64, tpu.core_type = #tpu.core_type<tc>, window_params = [{transform_indices = @transform_0, window_bounds = array<i64: 8, 784>}, {pipeline_mode = #tpu.pipeline_mode<synchronous>, transform_indices = @transform_1, window_bounds = array<i64: 784, 256>}, {pipeline_mode = #tpu.pipeline_mode<synchronous>, transform_indices = @transform_2, window_bounds = array<i64: 1, 256>}, {pipeline_mode = #tpu.pipeline_mode<synchronous>, transform_indices = @transform_3, window_bounds = array<i64: 256, 128>}, {pipeline_mode = #tpu.pipeline_mode<synchronous>, transform_indices = @transform_4, window_bounds = array<i64: 1, 128>}, {pipeline_mode = #tpu.pipeline_mode<synchronous>, transform_indices = @transform_5, window_bounds = array<i64: 128, 128>}, {pipeline_mode = #tpu.pipeline_mode<synchronous>, transform_indices = @transform_6, window_bounds = array<i64: 1, 128>}, {transform_indices = @transform_7, window_bounds = array<i64: 8, 128>}]} {
    %c0 = arith.constant 0 : index
    %c0_0 = arith.constant 0 : index
    %0 = vector.load %arg1[%c0, %c0_0] : memref<8x784xf32, #tpu.memory_space<vmem>>, vector<8x784xf32>
    %1 = arith.truncf %0 : vector<8x784xf32> to vector<8x784xbf16>
    %c0_1 = arith.constant 0 : index
    %c0_2 = arith.constant 0 : index
    %2 = vector.load %arg2[%c0_1, %c0_2] : memref<784x256xbf16, #tpu.memory_space<vmem>>, vector<784x256xbf16>
    %cst = arith.constant dense<0.000000e+00> : vector<8x256xf32>
    %3 = tpu.matmul %1, %2, %cst {dimension_numbers = #tpu.dot_dimension_numbers<[1], [0], [0], [1], [0, 0, 1, 1], [], []>} : vector<8x784xbf16>, vector<784x256xbf16>, vector<8x256xf32> -> vector<8x256xf32>
    %c0_3 = arith.constant 0 : index
    %c0_4 = arith.constant 0 : index
    %4 = vector.load %arg3[%c0_3, %c0_4] : memref<1x256xf32, #tpu.memory_space<vmem>>, vector<1x256xf32>
    %5 = vector.broadcast %4 : vector<1x256xf32> to vector<8x256xf32>
    %6 = arith.addf %3, %5 : vector<8x256xf32>
    %cst_5 = arith.constant 0.000000e+00 : f32
    %7 = vector.broadcast %cst_5 : f32 to vector<8x256xf32>
    %8 = arith.maximumf %6, %7 : vector<8x256xf32>
    %9 = arith.truncf %8 : vector<8x256xf32> to vector<8x256xbf16>
    %c0_6 = arith.constant 0 : index
    %c0_7 = arith.constant 0 : index
    %10 = vector.load %arg4[%c0_6, %c0_7] : memref<256x128xbf16, #tpu.memory_space<vmem>>, vector<256x128xbf16>
    %cst_8 = arith.constant dense<0.000000e+00> : vector<8x128xf32>
    %11 = tpu.matmul %9, %10, %cst_8 {dimension_numbers = #tpu.dot_dimension_numbers<[1], [0], [0], [1], [0, 0, 1, 1], [], []>} : vector<8x256xbf16>, vector<256x128xbf16>, vector<8x128xf32> -> vector<8x128xf32>
    %c0_9 = arith.constant 0 : index
    %c0_10 = arith.constant 0 : index
    %12 = vector.load %arg5[%c0_9, %c0_10] : memref<1x128xf32, #tpu.memory_space<vmem>>, vector<1x128xf32>
    %13 = vector.broadcast %12 : vector<1x128xf32> to vector<8x128xf32>
    %14 = arith.addf %11, %13 : vector<8x128xf32>
    %cst_11 = arith.constant 0.000000e+00 : f32
    %15 = vector.broadcast %cst_11 : f32 to vector<8x128xf32>
    %16 = arith.maximumf %14, %15 : vector<8x128xf32>
    %17 = arith.truncf %16 : vector<8x128xf32> to vector<8x128xbf16>
    %c0_12 = arith.constant 0 : index
    %c0_13 = arith.constant 0 : index
    %18 = vector.load %arg6[%c0_12, %c0_13] : memref<128x128xbf16, #tpu.memory_space<vmem>>, vector<128x128xbf16>
    %cst_14 = arith.constant dense<0.000000e+00> : vector<8x128xf32>
    %19 = tpu.matmul %17, %18, %cst_14 {dimension_numbers = #tpu.dot_dimension_numbers<[1], [0], [0], [1], [0, 0, 1, 1], [], []>} : vector<8x128xbf16>, vector<128x128xbf16>, vector<8x128xf32> -> vector<8x128xf32>
    %c0_15 = arith.constant 0 : index
    %c0_16 = arith.constant 0 : index
    %20 = vector.load %arg7[%c0_15, %c0_16] : memref<1x128xf32, #tpu.memory_space<vmem>>, vector<1x128xf32>
    %21 = vector.broadcast %20 : vector<1x128xf32> to vector<8x128xf32>
    %22 = arith.addf %19, %21 : vector<8x128xf32>
    %23 = arith.truncf %22 : vector<8x128xf32> to vector<8x128xbf16>
    %c0_17 = arith.constant 0 : index
    %c0_18 = arith.constant 0 : index
    %24 = vector.load %arg8[%c0_17, %c0_18] : memref<8x128xbf16, #tpu.memory_space<vmem>>, vector<8x128xbf16>
    tpu.vector_store %arg8[%c0_17, %c0_18], %23 {strides = array<i32>} : memref<8x128xbf16, #tpu.memory_space<vmem>>, vector<8x128xbf16>,
    return
  }
  func.func @transform_0(%arg0: i32) -> (i32, i32) {
    %c0_i32 = arith.constant 0 : i32
    %c0_i32_0 = arith.constant 0 : i32
    return %arg0, %c0_i32 : i32, i32
  }
  func.func @transform_1(%arg0: i32) -> (i32, i32) {
    %c0_i32 = arith.constant 0 : i32
    %c0_i32_0 = arith.constant 0 : i32
    %c0_i32_1 = arith.constant 0 : i32
    return %c0_i32, %c0_i32_0 : i32, i32
  }
  func.func @transform_2(%arg0: i32) -> (i32, i32) {
    %c0_i32 = arith.constant 0 : i32
    %c0_i32_0 = arith.constant 0 : i32
    %c0_i32_1 = arith.constant 0 : i32
    return %c0_i32, %c0_i32_0 : i32, i32
  }
  func.func @transform_3(%arg0: i32) -> (i32, i32) {
    %c0_i32 = arith.constant 0 : i32
    %c0_i32_0 = arith.constant 0 : i32
    %c0_i32_1 = arith.constant 0 : i32
    return %c0_i32, %c0_i32_0 : i32, i32
  }
  func.func @transform_4(%arg0: i32) -> (i32, i32) {
    %c0_i32 = arith.constant 0 : i32
    %c0_i32_0 = arith.constant 0 : i32
    %c0_i32_1 = arith.constant 0 : i32
    return %c0_i32, %c0_i32_0 : i32, i32
  }
  func.func @transform_5(%arg0: i32) -> (i32, i32) {
    %c0_i32 = arith.constant 0 : i32
    %c0_i32_0 = arith.constant 0 : i32
    %c0_i32_1 = arith.constant 0 : i32
    return %c0_i32, %c0_i32_0 : i32, i32
  }
  func.func @transform_6(%arg0: i32) -> (i32, i32) {
    %c0_i32 = arith.constant 0 : i32
    %c0_i32_0 = arith.constant 0 : i32
    %c0_i32_1 = arith.constant 0 : i32
    return %c0_i32, %c0_i32_0 : i32, i32
  }
  func.func @transform_7(%arg0: i32) -> (i32, i32) {
    %c0_i32 = arith.constant 0 : i32
    %c0_i32_0 = arith.constant 0 : i32
    return %arg0, %c0_i32 : i32, i32
  }
}

</mosaic_0001>

<llo_original>
// kernel: simple_mlp_forward.1
$region0: #{simple_mlp_forward.1}
  #allocation0 [shape = 'u32[]', space=smem, size = 0x4, offset = 0x4, fixed_abs, tag = 'smem constant byte address 0x4 - core index']
  #allocation1 [shape = 'u32[144,128]{1,0:T(1,128)}', space=vmem, size = 0x12000, scoped, tag = 'internal scratch']
  %s0 = inlined_call_operand.vmem [shape: f32[8,784], index: 0, kind: input, shape index: {}]
  %s1 = inlined_call_operand.vmem [shape: bf16[784,256], index: 1, kind: input, shape index: {}]
  %s2 = inlined_call_operand.vmem [shape: f32[1,256], index: 2, kind: input, shape index: {}]
  %s3 = inlined_call_operand.hbm [shape: bf16[256,128], index: 3, kind: input, shape index: {}]
  %s4 = inlined_call_operand.vmem [shape: f32[1,128], index: 4, kind: input, shape index: {}]
  %s5 = inlined_call_operand.hbm [shape: bf16[128,128], index: 5, kind: input, shape index: {}]
  %s6 = inlined_call_operand.vmem [shape: f32[1,128], index: 6, kind: input, shape index: {}]
  %s7 = inlined_call_operand.vmem [shape: bf16[8,128], index: 7, kind: output, shape index: {}]
  %s8 = sld [smem:[#allocation0]]
  $region46: #{simple_mlp_forward.1} parent=0
    _
  %s10 = ssub.s32 1, %s8
  %s11 = scalar_select 0, %s10, %s8
  $region1: #{simple_mlp_forward.1} parent=0
    #allocation2 [shape = 'u8[65536]{0}', space=vmem, size = 0x10000, scoped, tag = 'input window, operand 3, single buffered']
    #allocation3 [shape = 's32[1]{0}', space=sflag, size = 0x4, scoped, tag = 'scoped memory for simple_mlp_forward.1']
    #allocation4 [shape = 'u8[32768]{0}', space=vmem, size = 0x8000, scoped, tag = 'input window, operand 5, single buffered']
    #allocation5 [shape = 's32[1]{0}', space=sflag, size = 0x4, scoped, tag = 'scoped memory for simple_mlp_forward.1']
    %12 = vsyncpa [#allocation3], 0
    %13 = vsyncpa [#allocation5], 0
    // Predicated region
    $region2: #{simple_mlp_forward.1} parent=1 // pred_check
      _
    $region3: #{simple_mlp_forward.1} parent=1 // pred_check_branch
      %15 = sbr.rel (0) target = $region5
    $region4: #{simple_mlp_forward.1} parent=1 // pred_region
      _
    $region5: #{simple_mlp_forward.1} parent=1 // pred_fallthru
      _
    // Predicated region
    $region6: #{simple_mlp_forward.1} parent=1 // pred_check
      _
    $region7: #{simple_mlp_forward.1} parent=1 // pred_check_branch
      %17 = sbr.rel (0) target = $region9
    $region8: #{simple_mlp_forward.1} parent=1 // pred_region
      _
    $region9: #{simple_mlp_forward.1} parent=1 // pred_fallthru
      _
    // Predicated region
    $region10: #{simple_mlp_forward.1} parent=1 // pred_check
      _
    $region11: #{simple_mlp_forward.1} parent=1 // pred_check_branch
      %19 = sbr.rel (0) target = $region13
    $region12: #{simple_mlp_forward.1} parent=1 // pred_region
      _
    $region13: #{simple_mlp_forward.1} parent=1 // pred_fallthru
      _
    // Predicated region
    $region14: #{simple_mlp_forward.1} parent=1 // pred_check
      _
    $region15: #{simple_mlp_forward.1} parent=1 // pred_check_branch
      %21 = sbr.rel (0) target = $region17
    $region16: #{simple_mlp_forward.1} parent=1 // pred_region
      %s23 = ssub.s32 2048, 2048
      %24 = vsyncadd [#allocation3], %s23
      %s25 = sshll.u32 [#allocation2], 4
      %s26 = int_to_ptr.vmem [resolvable:$true] %s25
      %31 = dma.hbm_to_vmem [thread:$0]  %s3, 2048, %s26, [#allocation3], 64, 64, 4
    $region17: #{simple_mlp_forward.1} parent=1 // pred_fallthru
      _
    // Predicated region
    $region18: #{simple_mlp_forward.1} parent=1 // pred_check
      _
    $region19: #{simple_mlp_forward.1} parent=1 // pred_check_branch
      %33 = sbr.rel (0) target = $region21
    $region20: #{simple_mlp_forward.1} parent=1 // pred_region
      _
    $region21: #{simple_mlp_forward.1} parent=1 // pred_fallthru
      _
    // Predicated region
    $region22: #{simple_mlp_forward.1} parent=1 // pred_check
      _
    $region23: #{simple_mlp_forward.1} parent=1 // pred_check_branch
      %35 = sbr.rel (0) target = $region25
    $region24: #{simple_mlp_forward.1} parent=1 // pred_region
      %s37 = ssub.s32 1024, 1024
      %38 = vsyncadd [#allocation5], %s37
      %s39 = sshll.u32 [#allocation4], 4
      %s40 = int_to_ptr.vmem [resolvable:$true] %s39
      %45 = dma.hbm_to_vmem [thread:$0]  %s5, 1024, %s40, [#allocation5], 64, 64, 4
    $region25: #{simple_mlp_forward.1} parent=1 // pred_fallthru
      _
    // Predicated region
    $region26: #{simple_mlp_forward.1} parent=1 // pred_check
      _
    $region27: #{simple_mlp_forward.1} parent=1 // pred_check_branch
      %47 = sbr.rel (0) target = $region29
    $region28: #{simple_mlp_forward.1} parent=1 // pred_region
      _
    $region29: #{simple_mlp_forward.1} parent=1 // pred_fallthru
      _
    // Predicated region
    $region30: #{simple_mlp_forward.1} parent=1 // pred_check
      _
    $region31: #{simple_mlp_forward.1} parent=1 // pred_check_branch
      %49 = sbr.rel (0) target = $region33
    $region32: #{simple_mlp_forward.1} parent=1 // pred_region
      %50 = dma.done [#allocation3], 2048
    $region33: #{simple_mlp_forward.1} parent=1 // pred_fallthru
      _
    // Predicated region
    $region34: #{simple_mlp_forward.1} parent=1 // pred_check
      _
    $region35: #{simple_mlp_forward.1} parent=1 // pred_check_branch
      %52 = sbr.rel (0) target = $region37
    $region36: #{simple_mlp_forward.1} parent=1 // pred_region
      %53 = dma.done [#allocation5], 1024
    $region37: #{simple_mlp_forward.1} parent=1 // pred_fallthru
      _
    %v55 = vld [vmem:[%s0] sm:$0xff]
    %v56 = vld [vmem:[%s0 + $0x8] sm:$0xff]
    %v57 = vld [vmem:[%s0 + $0x10] sm:$0xff]
    %v58 = vld [vmem:[%s0 + $0x18] sm:$0xff]
    %v59 = vld [vmem:[%s0 + $0x20] sm:$0xff]
    %v60 = vld [vmem:[%s0 + $0x28] sm:$0xff]
    %v61 = vld [vmem:[%s0 + $0x30] sm:$0xff]
    %v62 = vpack.c.bf16 %v55, %v55
    %v63 = vpack.c.bf16 %v56, %v56
    %v64 = vpack.c.bf16 %v57, %v57
    %v65 = vpack.c.bf16 %v58, %v58
    %v66 = vpack.c.bf16 %v59, %v59
    %v67 = vpack.c.bf16 %v60, %v60
    %v68 = vpack.c.bf16 %v61, %v61
    %v69 = vld [vmem:[%s1] sm:$0xff]
    %v70 = vld [vmem:[%s1 + $0x8] sm:$0xff]
    %v71 = vld [vmem:[%s1 + $0x10] sm:$0xff]
    %v72 = vld [vmem:[%s1 + $0x18] sm:$0xff]
    %v73 = vld [vmem:[%s1 + $0x20] sm:$0xff]
    %v74 = vld [vmem:[%s1 + $0x28] sm:$0xff]
    %v75 = vld [vmem:[%s1 + $0x30] sm:$0xff]
    %v76 = vld [vmem:[%s1 + $0x38] sm:$0xff]
    %v77 = vld [vmem:[%s1 + $0x40] sm:$0xff]
    %v78 = vld [vmem:[%s1 + $0x48] sm:$0xff]
    %v79 = vld [vmem:[%s1 + $0x50] sm:$0xff]
    %v80 = vld [vmem:[%s1 + $0x58] sm:$0xff]
    %v81 = vld [vmem:[%s1 + $0x60] sm:$0xff]
    %v82 = vld [vmem:[%s1 + $0x68] sm:$0xff]
    %v83 = vld [vmem:[%s1 + $0x70] sm:$0xff]
    %v84 = vld [vmem:[%s1 + $0x78] sm:$0xff]
    %v85 = vld [vmem:[%s1 + $0x80] sm:$0xff]
    %v86 = vld [vmem:[%s1 + $0x88] sm:$0xff]
    %v87 = vld [vmem:[%s1 + $0x90] sm:$0xff]
    %v88 = vld [vmem:[%s1 + $0x98] sm:$0xff]
    %v89 = vld [vmem:[%s1 + $0xa0] sm:$0xff]
    %v90 = vld [vmem:[%s1 + $0xa8] sm:$0xff]
    %v91 = vld [vmem:[%s1 + $0xb0] sm:$0xff]
    %v92 = vld [vmem:[%s1 + $0xb8] sm:$0xff]
    %v93 = vld [vmem:[%s1 + $0xc0] sm:$0xff]
    %v94 = vld [vmem:[%s1 + $0xc8] sm:$0xff]
    %v95 = vld [vmem:[%s1 + $0xd0] sm:$0xff]
    %v96 = vld [vmem:[%s1 + $0xd8] sm:$0xff]
    %v97 = vld [vmem:[%s1 + $0xe0] sm:$0xff]
    %v98 = vld [vmem:[%s1 + $0xe8] sm:$0xff]
    %v99 = vld [vmem:[%s1 + $0xf0] sm:$0xff]
    %v100 = vld [vmem:[%s1 + $0xf8] sm:$0xff]
    %v101 = vld [vmem:[%s1 + $0x100] sm:$0xff]
    %v102 = vld [vmem:[%s1 + $0x108] sm:$0xff]
    %v103 = vld [vmem:[%s1 + $0x110] sm:$0xff]
    %v104 = vld [vmem:[%s1 + $0x118] sm:$0xff]
    %v105 = vld [vmem:[%s1 + $0x120] sm:$0xff]
    %v106 = vld [vmem:[%s1 + $0x128] sm:$0xff]
    %v107 = vld [vmem:[%s1 + $0x130] sm:$0xff]
    %v108 = vld [vmem:[%s1 + $0x138] sm:$0xff]
    %v109 = vld [vmem:[%s1 + $0x140] sm:$0xff]
    %v110 = vld [vmem:[%s1 + $0x148] sm:$0xff]
    %v111 = vld [vmem:[%s1 + $0x150] sm:$0xff]
    %v112 = vld [vmem:[%s1 + $0x158] sm:$0xff]
    %v113 = vld [vmem:[%s1 + $0x160] sm:$0xff]
    %v114 = vld [vmem:[%s1 + $0x168] sm:$0xff]
    %v115 = vld [vmem:[%s1 + $0x170] sm:$0xff]
    %v116 = vld [vmem:[%s1 + $0x178] sm:$0xff]
    %v117 = vld [vmem:[%s1 + $0x180] sm:$0xff]
    %v118 = vld [vmem:[%s1 + $0x188] sm:$0xff]
    %v119 = vld [vmem:[%s1 + $0x190] sm:$0xff]
    %v120 = vld [vmem:[%s1 + $0x198] sm:$0xff]
    %v121 = vld [vmem:[%s1 + $0x1a0] sm:$0xff]
    %v122 = vld [vmem:[%s1 + $0x1a8] sm:$0xff]
    %v123 = vld [vmem:[%s1 + $0x1b0] sm:$0xff]
    %v124 = vld [vmem:[%s1 + $0x1b8] sm:$0xff]
    %v125 = vld [vmem:[%s1 + $0x1c0] sm:$0xff]
    %v126 = vld [vmem:[%s1 + $0x1c8] sm:$0xff]
    %v127 = vld [vmem:[%s1 + $0x1d0] sm:$0xff]
    %v128 = vld [vmem:[%s1 + $0x1d8] sm:$0xff]
    %v129 = vld [vmem:[%s1 + $0x1e0] sm:$0xff]
    %v130 = vld [vmem:[%s1 + $0x1e8] sm:$0xff]
    %v131 = vld [vmem:[%s1 + $0x1f0] sm:$0xff]
    %v132 = vld [vmem:[%s1 + $0x1f8] sm:$0xff]
    %v133 = vld [vmem:[%s1 + $0x200] sm:$0xff]
    %v134 = vld [vmem:[%s1 + $0x208] sm:$0xff]
    %v135 = vld [vmem:[%s1 + $0x210] sm:$0xff]
    %v136 = vld [vmem:[%s1 + $0x218] sm:$0xff]
    %v137 = vld [vmem:[%s1 + $0x220] sm:$0xff]
    %v138 = vld [vmem:[%s1 + $0x228] sm:$0xff]
    %v139 = vld [vmem:[%s1 + $0x230] sm:$0xff]
    %v140 = vld [vmem:[%s1 + $0x238] sm:$0xff]
    %v141 = vld [vmem:[%s1 + $0x240] sm:$0xff]
    %v142 = vld [vmem:[%s1 + $0x248] sm:$0xff]
    %v143 = vld [vmem:[%s1 + $0x250] sm:$0xff]
    %v144 = vld [vmem:[%s1 + $0x258] sm:$0xff]
    %v145 = vld [vmem:[%s1 + $0x260] sm:$0xff]
    %v146 = vld [vmem:[%s1 + $0x268] sm:$0xff]
    %v147 = vld [vmem:[%s1 + $0x270] sm:$0xff]
    %v148 = vld [vmem:[%s1 + $0x278] sm:$0xff]
    %v149 = vld [vmem:[%s1 + $0x280] sm:$0xff]
    %v150 = vld [vmem:[%s1 + $0x288] sm:$0xff]
    %v151 = vld [vmem:[%s1 + $0x290] sm:$0xff]
    %v152 = vld [vmem:[%s1 + $0x298] sm:$0xff]
    %v153 = vld [vmem:[%s1 + $0x2a0] sm:$0xff]
    %v154 = vld [vmem:[%s1 + $0x2a8] sm:$0xff]
    %v155 = vld [vmem:[%s1 + $0x2b0] sm:$0xff]
    %v156 = vld [vmem:[%s1 + $0x2b8] sm:$0xff]
    %v157 = vld [vmem:[%s1 + $0x2c0] sm:$0xff]
    %v158 = vld [vmem:[%s1 + $0x2c8] sm:$0xff]
    %v159 = vld [vmem:[%s1 + $0x2d0] sm:$0xff]
    %v160 = vld [vmem:[%s1 + $0x2d8] sm:$0xff]
    %v161 = vld [vmem:[%s1 + $0x2e0] sm:$0xff]
    %v162 = vld [vmem:[%s1 + $0x2e8] sm:$0xff]
    %v163 = vld [vmem:[%s1 + $0x2f0] sm:$0xff]
    %v164 = vld [vmem:[%s1 + $0x2f8] sm:$0xff]
    %v165 = vld [vmem:[%s1 + $0x300] sm:$0xff]
    %v166 = vld [vmem:[%s1 + $0x308] sm:$0xff]
    %v167 = vld [vmem:[%s2] sm:$0x3]
    %v169 = vlaneseq
    %v170 = vshrl.u32 %v169, 7
    %v171 = vsub.s32 0, %v170
    %v172 = vrot.slane %v167, %v171
    %v173 = vlaneseq
    %v174 = vshrl.u32 %v173, 7
    %v175 = vsub.s32 1, %v174
    %v176 = vrot.slane %v167, %v175
    %v277 = vunpack.c.l.b16 %v69
    %v278 = vunpack.c.h.b16 %v69
    %v279 = vunpack.c.l.b16 %v70
    %v280 = vunpack.c.h.b16 %v70
    %v281 = vunpack.c.l.b16 %v71
    %v282 = vunpack.c.h.b16 %v71
    %v283 = vunpack.c.l.b16 %v72
    %v284 = vunpack.c.h.b16 %v72
    %v285 = vunpack.c.l.b16 %v73
    %v286 = vunpack.c.h.b16 %v73
    %v287 = vunpack.c.l.b16 %v74
    %v288 = vunpack.c.h.b16 %v74
    %v289 = vunpack.c.l.b16 %v75
    %v290 = vunpack.c.h.b16 %v75
    %v291 = vunpack.c.l.b16 %v76
    %v292 = vunpack.c.h.b16 %v76
    %v293 = vunpack.c.l.b16 %v77
    %v294 = vunpack.c.h.b16 %v77
    %v295 = vunpack.c.l.b16 %v78
    %v296 = vunpack.c.h.b16 %v78
    %v297 = vunpack.c.l.b16 %v79
    %v298 = vunpack.c.h.b16 %v79
    %v299 = vunpack.c.l.b16 %v80
    %v300 = vunpack.c.h.b16 %v80
    %v301 = vunpack.c.l.b16 %v81
    %v302 = vunpack.c.h.b16 %v81
    %v303 = vunpack.c.l.b16 %v82
    %v304 = vunpack.c.h.b16 %v82
    %v305 = vunpack.c.l.b16 %v83
    %v306 = vunpack.c.h.b16 %v83
    %v307 = vunpack.c.l.b16 %v84
    %v308 = vunpack.c.h.b16 %v84
    %v309 = vunpack.c.l.b16 %v85
    %v310 = vunpack.c.h.b16 %v85
    %v311 = vunpack.c.l.b16 %v86
    %v312 = vunpack.c.h.b16 %v86
    %v313 = vunpack.c.l.b16 %v87
    %v314 = vunpack.c.h.b16 %v87
    %v315 = vunpack.c.l.b16 %v88
    %v316 = vunpack.c.h.b16 %v88
    %v317 = vunpack.c.l.b16 %v89
    %v318 = vunpack.c.h.b16 %v89
    %v319 = vunpack.c.l.b16 %v90
    %v320 = vunpack.c.h.b16 %v90
    %v321 = vunpack.c.l.b16 %v91
    %v322 = vunpack.c.h.b16 %v91
    %v323 = vunpack.c.l.b16 %v92
    %v324 = vunpack.c.h.b16 %v92
    %v325 = vunpack.c.l.b16 %v93
    %v326 = vunpack.c.h.b16 %v93
    %v327 = vunpack.c.l.b16 %v94
    %v328 = vunpack.c.h.b16 %v94
    %v329 = vunpack.c.l.b16 %v95
    %v330 = vunpack.c.h.b16 %v95
    %v331 = vunpack.c.l.b16 %v96
    %v332 = vunpack.c.h.b16 %v96
    %v333 = vunpack.c.l.b16 %v97
    %v334 = vunpack.c.h.b16 %v97
    %v335 = vunpack.c.l.b16 %v98
    %v336 = vunpack.c.h.b16 %v98
    %v337 = vunpack.c.l.b16 %v99
    %v338 = vunpack.c.h.b16 %v99
    %v339 = vunpack.c.l.b16 %v100
    %v340 = vunpack.c.h.b16 %v100
    %v341 = vunpack.c.l.b16 %v101
    %v342 = vunpack.c.h.b16 %v101
    %v343 = vunpack.c.l.b16 %v102
    %v344 = vunpack.c.h.b16 %v102
    %v345 = vunpack.c.l.b16 %v103
    %v346 = vunpack.c.h.b16 %v103
    %v347 = vunpack.c.l.b16 %v104
    %v348 = vunpack.c.h.b16 %v104
    %v349 = vunpack.c.l.b16 %v105
    %v350 = vunpack.c.h.b16 %v105
    %v351 = vunpack.c.l.b16 %v106
    %v352 = vunpack.c.h.b16 %v106
    %v353 = vunpack.c.l.b16 %v107
    %v354 = vunpack.c.h.b16 %v107
    %v355 = vunpack.c.l.b16 %v108
    %v356 = vunpack.c.h.b16 %v108
    %v357 = vunpack.c.l.b16 %v109
    %v358 = vunpack.c.h.b16 %v109
    %v359 = vunpack.c.l.b16 %v110
    %v360 = vunpack.c.h.b16 %v110
    %v361 = vunpack.c.l.b16 %v111
    %v362 = vunpack.c.h.b16 %v111
    %v363 = vunpack.c.l.b16 %v112
    %v364 = vunpack.c.h.b16 %v112
    %v365 = vunpack.c.l.b16 %v113
    %v366 = vunpack.c.h.b16 %v113
    %v367 = vunpack.c.l.b16 %v114
    %v368 = vunpack.c.h.b16 %v114
    %v369 = vunpack.c.l.b16 %v115
    %v370 = vunpack.c.h.b16 %v115
    %v371 = vunpack.c.l.b16 %v116
    %v372 = vunpack.c.h.b16 %v116
    %v373 = vunpack.c.l.b16 %v117
    %v374 = vunpack.c.h.b16 %v117
    %v375 = vunpack.c.l.b16 %v118
    %v376 = vunpack.c.h.b16 %v118
    %v377 = vunpack.c.l.b16 %v119
    %v378 = vunpack.c.h.b16 %v119
    %v379 = vunpack.c.l.b16 %v120
    %v380 = vunpack.c.h.b16 %v120
    %v381 = vunpack.c.l.b16 %v121
    %v382 = vunpack.c.h.b16 %v121
    %v383 = vunpack.c.l.b16 %v122
    %v384 = vunpack.c.h.b16 %v122
    %v385 = vunpack.c.l.b16 %v123
    %v386 = vunpack.c.h.b16 %v123
    %v387 = vunpack.c.l.b16 %v124
    %v388 = vunpack.c.h.b16 %v124
    %v389 = vunpack.c.l.b16 %v125
    %v390 = vunpack.c.h.b16 %v125
    %v391 = vunpack.c.l.b16 %v126
    %v392 = vunpack.c.h.b16 %v126
    %v393 = vunpack.c.l.b16 %v127
    %v394 = vunpack.c.h.b16 %v127
    %v395 = vunpack.c.l.b16 %v128
    %v396 = vunpack.c.h.b16 %v128
    %v397 = vunpack.c.l.b16 %v129
    %v398 = vunpack.c.h.b16 %v129
    %v399 = vunpack.c.l.b16 %v130
    %v400 = vunpack.c.h.b16 %v130
    %v401 = vunpack.c.l.b16 %v131
    %v402 = vunpack.c.h.b16 %v131
    %v403 = vunpack.c.l.b16 %v132
    %v404 = vunpack.c.h.b16 %v132
    %v405 = vunpack.c.l.b16 %v133
    %v406 = vunpack.c.h.b16 %v133
    %v407 = vunpack.c.l.b16 %v134
    %v408 = vunpack.c.h.b16 %v134
    %v409 = vunpack.c.l.b16 %v135
    %v410 = vunpack.c.h.b16 %v135
    %v411 = vunpack.c.l.b16 %v136
    %v412 = vunpack.c.h.b16 %v136
    %v413 = vunpack.c.l.b16 %v137
    %v414 = vunpack.c.h.b16 %v137
    %v415 = vunpack.c.l.b16 %v138
    %v416 = vunpack.c.h.b16 %v138
    %v417 = vunpack.c.l.b16 %v139
    %v418 = vunpack.c.h.b16 %v139
    %v419 = vunpack.c.l.b16 %v140
    %v420 = vunpack.c.h.b16 %v140
    %v421 = vunpack.c.l.b16 %v141
    %v422 = vunpack.c.h.b16 %v141
    %v423 = vunpack.c.l.b16 %v142
    %v424 = vunpack.c.h.b16 %v142
    %v425 = vunpack.c.l.b16 %v143
    %v426 = vunpack.c.h.b16 %v143
    %v427 = vunpack.c.l.b16 %v144
    %v428 = vunpack.c.h.b16 %v144
    %v429 = vunpack.c.l.b16 %v145
    %v430 = vunpack.c.h.b16 %v145
    %v431 = vunpack.c.l.b16 %v146
    %v432 = vunpack.c.h.b16 %v146
    %v433 = vunpack.c.l.b16 %v147
    %v434 = vunpack.c.h.b16 %v147
    %v435 = vunpack.c.l.b16 %v148
    %v436 = vunpack.c.h.b16 %v148
    %v437 = vunpack.c.l.b16 %v149
    %v438 = vunpack.c.h.b16 %v149
    %v439 = vunpack.c.l.b16 %v150
    %v440 = vunpack.c.h.b16 %v150
    %v441 = vunpack.c.l.b16 %v151
    %v442 = vunpack.c.h.b16 %v151
    %v443 = vunpack.c.l.b16 %v152
    %v444 = vunpack.c.h.b16 %v152
    %v445 = vunpack.c.l.b16 %v153
    %v446 = vunpack.c.h.b16 %v153
    %v447 = vunpack.c.l.b16 %v154
    %v448 = vunpack.c.h.b16 %v154
    %v449 = vunpack.c.l.b16 %v155
    %v450 = vunpack.c.h.b16 %v155
    %v451 = vunpack.c.l.b16 %v156
    %v452 = vunpack.c.h.b16 %v156
    %v453 = vunpack.c.l.b16 %v157
    %v454 = vunpack.c.h.b16 %v157
    %v455 = vunpack.c.l.b16 %v158
    %v456 = vunpack.c.h.b16 %v158
    %v457 = vunpack.c.l.b16 %v159
    %v458 = vunpack.c.h.b16 %v159
    %v459 = vunpack.c.l.b16 %v160
    %v460 = vunpack.c.h.b16 %v160
    %v461 = vunpack.c.l.b16 %v161
    %v462 = vunpack.c.h.b16 %v161
    %v463 = vunpack.c.l.b16 %v162
    %v464 = vunpack.c.h.b16 %v162
    %v465 = vunpack.c.l.b16 %v163
    %v466 = vunpack.c.h.b16 %v163
    %v467 = vunpack.c.l.b16 %v164
    %v468 = vunpack.c.h.b16 %v164
    %v469 = vunpack.c.l.b16 %v165
    %v470 = vunpack.c.h.b16 %v165
    %v471 = vunpack.c.l.b16 %v166
    %v472 = vunpack.c.h.b16 %v166
    %v473 = vpack.c.b16 %v279, %v277
    %v474 = vpack.c.b16 %v280, %v278
    %v475 = vpack.c.b16 %v283, %v281
    %v476 = vpack.c.b16 %v284, %v282
    %v477 = vpack.c.b16 %v287, %v285
    %v478 = vpack.c.b16 %v288, %v286
    %v479 = vpack.c.b16 %v291, %v289
    %v480 = vpack.c.b16 %v292, %v290
    %v481 = vpack.c.b16 %v295, %v293
    %v482 = vpack.c.b16 %v296, %v294
    %v483 = vpack.c.b16 %v299, %v297
    %v484 = vpack.c.b16 %v300, %v298
    %v485 = vpack.c.b16 %v303, %v301
    %v486 = vpack.c.b16 %v304, %v302
    %v487 = vpack.c.b16 %v307, %v305
    %v488 = vpack.c.b16 %v308, %v306
    %v489 = vpack.c.b16 %v311, %v309
    %v490 = vpack.c.b16 %v312, %v310
    %v491 = vpack.c.b16 %v315, %v313
    %v492 = vpack.c.b16 %v316, %v314
    %v493 = vpack.c.b16 %v319, %v317
    %v494 = vpack.c.b16 %v320, %v318
    %v495 = vpack.c.b16 %v323, %v321
    %v496 = vpack.c.b16 %v324, %v322
    %v497 = vpack.c.b16 %v327, %v325
    %v498 = vpack.c.b16 %v328, %v326
    %v499 = vpack.c.b16 %v331, %v329
    %v500 = vpack.c.b16 %v332, %v330
    %v501 = vpack.c.b16 %v335, %v333
    %v502 = vpack.c.b16 %v336, %v334
    %v503 = vpack.c.b16 %v339, %v337
    %v504 = vpack.c.b16 %v340, %v338
    %v505 = vpack.c.b16 %v343, %v341
    %v506 = vpack.c.b16 %v344, %v342
    %v507 = vpack.c.b16 %v347, %v345
    %v508 = vpack.c.b16 %v348, %v346
    %v509 = vpack.c.b16 %v351, %v349
    %v510 = vpack.c.b16 %v352, %v350
    %v511 = vpack.c.b16 %v355, %v353
    %v512 = vpack.c.b16 %v356, %v354
    %v513 = vpack.c.b16 %v359, %v357
    %v514 = vpack.c.b16 %v360, %v358
    %v515 = vpack.c.b16 %v363, %v361
    %v516 = vpack.c.b16 %v364, %v362
    %v517 = vpack.c.b16 %v367, %v365
    %v518 = vpack.c.b16 %v368, %v366
    %v519 = vpack.c.b16 %v371, %v369
    %v520 = vpack.c.b16 %v372, %v370
    %v521 = vpack.c.b16 %v375, %v373
    %v522 = vpack.c.b16 %v376, %v374
    %v523 = vpack.c.b16 %v379, %v377
    %v524 = vpack.c.b16 %v380, %v378
    %v525 = vpack.c.b16 %v383, %v381
    %v526 = vpack.c.b16 %v384, %v382
    %v527 = vpack.c.b16 %v387, %v385
    %v528 = vpack.c.b16 %v388, %v386
    %v529 = vpack.c.b16 %v391, %v389
    %v530 = vpack.c.b16 %v392, %v390
    %v531 = vpack.c.b16 %v395, %v393
    %v532 = vpack.c.b16 %v396, %v394
    %v533 = vpack.c.b16 %v399, %v397
    %v534 = vpack.c.b16 %v400, %v398
    %v535 = vpack.c.b16 %v403, %v401
    %v536 = vpack.c.b16 %v404, %v402
    %v537 = vpack.c.b16 %v407, %v405
    %v538 = vpack.c.b16 %v408, %v406
    %v539 = vpack.c.b16 %v411, %v409
    %v540 = vpack.c.b16 %v412, %v410
    %v541 = vpack.c.b16 %v415, %v413
    %v542 = vpack.c.b16 %v416, %v414
    %v543 = vpack.c.b16 %v419, %v417
    %v544 = vpack.c.b16 %v420, %v418
    %v545 = vpack.c.b16 %v423, %v421
    %v546 = vpack.c.b16 %v424, %v422
    %v547 = vpack.c.b16 %v427, %v425
    %v548 = vpack.c.b16 %v428, %v426
    %v549 = vpack.c.b16 %v431, %v429
    %v550 = vpack.c.b16 %v432, %v430
    %v551 = vpack.c.b16 %v435, %v433
    %v552 = vpack.c.b16 %v436, %v434
    %v553 = vpack.c.b16 %v439, %v437
    %v554 = vpack.c.b16 %v440, %v438
    %v555 = vpack.c.b16 %v443, %v441
    %v556 = vpack.c.b16 %v444, %v442
    %v557 = vpack.c.b16 %v447, %v445
    %v558 = vpack.c.b16 %v448, %v446
    %v559 = vpack.c.b16 %v451, %v449
    %v560 = vpack.c.b16 %v452, %v450
    %v561 = vpack.c.b16 %v455, %v453
    %v562 = vpack.c.b16 %v456, %v454
    %v563 = vpack.c.b16 %v459, %v457
    %v564 = vpack.c.b16 %v460, %v458
    %v565 = vpack.c.b16 %v463, %v461
    %v566 = vpack.c.b16 %v464, %v462
    %v567 = vpack.c.b16 %v467, %v465
    %v568 = vpack.c.b16 %v468, %v466
    %v569 = vpack.c.b16 %v471, %v469
    %v570 = vpack.c.b16 %v472, %v470
    %vm669 = vcmask 130048
    %v671 = vsel %vm669, %v68, 0
    %673 = vmatprep.subr.bf16.mxu0 %v488
    %674 = vmatpush1.bf16.msra.mxu0 %v487
    %675 = vmatprep.subr.bf16.mxu0 %v486
    %676 = vmatpush1.bf16.msra.mxu0 %v485
    %677 = vmatprep.subr.bf16.mxu0 %v484
    %678 = vmatpush1.bf16.msra.mxu0 %v483
    %679 = vmatprep.subr.bf16.mxu0 %v482
    %680 = vmatpush1.bf16.msra.mxu0 %v481
    %681 = vmatprep.subr.bf16.mxu0 %v480
    %682 = vmatpush1.bf16.msra.mxu0 %v479
    %683 = vmatprep.subr.bf16.mxu0 %v478
    %684 = vmatpush1.bf16.msra.mxu0 %v477
    %685 = vmatprep.subr.bf16.mxu0 %v476
    %686 = vmatpush1.bf16.msra.mxu0 %v475
    %687 = vmatprep.subr.bf16.mxu0 %v474
    %688 = vmatpush1.bf16.msra.mxu0 %v473
    %689 = vmatprep.subr.bf16.mxu0 %v504
    %690 = vmatpush2.bf16.msra.mxu0 %v503
    %691 = vmatprep.subr.bf16.mxu0 %v502
    %692 = vmatpush2.bf16.msra.mxu0 %v501
    %693 = vmatprep.subr.bf16.mxu0 %v500
    %694 = vmatpush2.bf16.msra.mxu0 %v499
    %695 = vmatprep.subr.bf16.mxu0 %v498
    %696 = vmatpush2.bf16.msra.mxu0 %v497
    %697 = vmatprep.subr.bf16.mxu0 %v496
    %698 = vmatpush2.bf16.msra.mxu0 %v495
    %699 = vmatprep.subr.bf16.mxu0 %v494
    %700 = vmatpush2.bf16.msra.mxu0 %v493
    %701 = vmatprep.subr.bf16.mxu0 %v492
    %702 = vmatpush2.bf16.msra.mxu0 %v491
    %703 = vmatprep.subr.bf16.mxu0 %v490
    %704 = vmatpush2.bf16.msra.mxu0 %v489
    %705 = vmatprep.mubr.bf16.mxu0 %v63
    %706 = vmatmul.mubr.bf16.gmra.mxu0 %v62
    %v707 = vpop.f32.mrf.mxu0
    %v708 = vadd.f32 %v172, %v707
    %v709 = vpop.f32.mrf.mxu0
    %v710 = vadd.f32 %v176, %v709
    %v711 = vpop.f32.mrf.mxu0
    %v712 = vpop.f32.mrf.mxu0
    %713 = vdwg.mxu0
    %714 = vmatprep.subr.bf16.mxu0 %v520
    %715 = vmatpush1.bf16.msra.mxu0 %v519
    %716 = vmatprep.subr.bf16.mxu0 %v518
    %717 = vmatpush1.bf16.msra.mxu0 %v517
    %718 = vmatprep.subr.bf16.mxu0 %v516
    %719 = vmatpush1.bf16.msra.mxu0 %v515
    %720 = vmatprep.subr.bf16.mxu0 %v514
    %721 = vmatpush1.bf16.msra.mxu0 %v513
    %722 = vmatprep.subr.bf16.mxu0 %v512
    %723 = vmatpush1.bf16.msra.mxu0 %v511
    %724 = vmatprep.subr.bf16.mxu0 %v510
    %725 = vmatpush1.bf16.msra.mxu0 %v509
    %726 = vmatprep.subr.bf16.mxu0 %v508
    %727 = vmatpush1.bf16.msra.mxu0 %v507
    %728 = vmatprep.subr.bf16.mxu0 %v506
    %729 = vmatpush1.bf16.msra.mxu0 %v505
    %730 = vmatprep.subr.bf16.mxu0 %v536
    %731 = vmatpush2.bf16.msra.mxu0 %v535
    %732 = vmatprep.subr.bf16.mxu0 %v534
    %733 = vmatpush2.bf16.msra.mxu0 %v533
    %734 = vmatprep.subr.bf16.mxu0 %v532
    %735 = vmatpush2.bf16.msra.mxu0 %v531
    %736 = vmatprep.subr.bf16.mxu0 %v530
    %737 = vmatpush2.bf16.msra.mxu0 %v529
    %738 = vmatprep.subr.bf16.mxu0 %v528
    %739 = vmatpush2.bf16.msra.mxu0 %v527
    %740 = vmatprep.subr.bf16.mxu0 %v526
    %741 = vmatpush2.bf16.msra.mxu0 %v525
    %742 = vmatprep.subr.bf16.mxu0 %v524
    %743 = vmatpush2.bf16.msra.mxu0 %v523
    %744 = vmatprep.subr.bf16.mxu0 %v522
    %745 = vmatpush2.bf16.msra.mxu0 %v521
    %746 = vmatprep.mubr.bf16.mxu0 %v65
    %747 = vmatmul.mubr.bf16.gmra.mxu0 %v64
    %v748 = vpop.f32.mrf.mxu0
    %v749 = vadd.f32 %v708, %v748
    %v750 = vpop.f32.mrf.mxu0
    %v751 = vadd.f32 %v710, %v750
    %v752 = vpop.f32.mrf.mxu0
    %v753 = vpop.f32.mrf.mxu0
    %754 = vdwg.mxu0
    %755 = vmatprep.subr.bf16.mxu0 %v552
    %756 = vmatpush1.bf16.msra.mxu0 %v551
    %757 = vmatprep.subr.bf16.mxu0 %v550
    %758 = vmatpush1.bf16.msra.mxu0 %v549
    %759 = vmatprep.subr.bf16.mxu0 %v548
    %760 = vmatpush1.bf16.msra.mxu0 %v547
    %761 = vmatprep.subr.bf16.mxu0 %v546
    %762 = vmatpush1.bf16.msra.mxu0 %v545
    %763 = vmatprep.subr.bf16.mxu0 %v544
    %764 = vmatpush1.bf16.msra.mxu0 %v543
    %765 = vmatprep.subr.bf16.mxu0 %v542
    %766 = vmatpush1.bf16.msra.mxu0 %v541
    %767 = vmatprep.subr.bf16.mxu0 %v540
    %768 = vmatpush1.bf16.msra.mxu0 %v539
    %769 = vmatprep.subr.bf16.mxu0 %v538
    %770 = vmatpush1.bf16.msra.mxu0 %v537
    %771 = vmatprep.subr.bf16.mxu0 %v568
    %772 = vmatpush2.bf16.msra.mxu0 %v567
    %773 = vmatprep.subr.bf16.mxu0 %v566
    %774 = vmatpush2.bf16.msra.mxu0 %v565
    %775 = vmatprep.subr.bf16.mxu0 %v564
    %776 = vmatpush2.bf16.msra.mxu0 %v563
    %777 = vmatprep.subr.bf16.mxu0 %v562
    %778 = vmatpush2.bf16.msra.mxu0 %v561
    %779 = vmatprep.subr.bf16.mxu0 %v560
    %780 = vmatpush2.bf16.msra.mxu0 %v559
    %781 = vmatprep.subr.bf16.mxu0 %v558
    %782 = vmatpush2.bf16.msra.mxu0 %v557
    %783 = vmatprep.subr.bf16.mxu0 %v556
    %784 = vmatpush2.bf16.msra.mxu0 %v555
    %785 = vmatprep.subr.bf16.mxu0 %v554
    %786 = vmatpush2.bf16.msra.mxu0 %v553
    %787 = vmatprep.mubr.bf16.mxu0 %v67
    %788 = vmatmul.mubr.bf16.gmra.mxu0 %v66
    %v789 = vpop.f32.mrf.mxu0
    %v790 = vadd.f32 %v749, %v789
    %v791 = vpop.f32.mrf.mxu0
    %v792 = vadd.f32 %v751, %v791
    %v793 = vpop.f32.mrf.mxu0
    %v794 = vpop.f32.mrf.mxu0
    %795 = vdwg.mxu0
    %796 = vmatprep.subr.bf16.mxu0 0
    %797 = vmatpush1.bf16.msra.mxu0 0
    %798 = vmatprep.subr.bf16.mxu0 0
    %799 = vmatpush1.bf16.msra.mxu0 0
    %800 = vmatprep.subr.bf16.mxu0 0
    %801 = vmatpush1.bf16.msra.mxu0 0
    %802 = vmatprep.subr.bf16.mxu0 0
    %803 = vmatpush1.bf16.msra.mxu0 0
    %804 = vmatprep.subr.bf16.mxu0 0
    %805 = vmatpush1.bf16.msra.mxu0 0
    %806 = vmatprep.subr.bf16.mxu0 0
    %807 = vmatpush1.bf16.msra.mxu0 0
    %808 = vmatprep.subr.bf16.mxu0 0
    %809 = vmatpush1.bf16.msra.mxu0 0
    %810 = vmatprep.subr.bf16.mxu0 %v570
    %811 = vmatpush1.bf16.msra.mxu0 %v569
    %812 = vmatprep.subr.bf16.mxu0 0
    %813 = vmatpush2.bf16.msra.mxu0 0
    %814 = vmatprep.subr.bf16.mxu0 0
    %815 = vmatpush2.bf16.msra.mxu0 0
    %816 = vmatprep.subr.bf16.mxu0 0
    %817 = vmatpush2.bf16.msra.mxu0 0
    %818 = vmatprep.subr.bf16.mxu0 0
    %819 = vmatpush2.bf16.msra.mxu0 0
    %820 = vmatprep.subr.bf16.mxu0 0
    %821 = vmatpush2.bf16.msra.mxu0 0
    %822 = vmatprep.subr.bf16.mxu0 0
    %823 = vmatpush2.bf16.msra.mxu0 0
    %824 = vmatprep.subr.bf16.mxu0 0
    %825 = vmatpush2.bf16.msra.mxu0 0
    %826 = vmatprep.subr.bf16.mxu0 0
    %827 = vmatpush2.bf16.msra.mxu0 0
    %828 = vmatprep.mubr.bf16.mxu0 0
    %829 = vmatmul.mubr.bf16.gmra.mxu0 %v671
    %v830 = vpop.f32.mrf.mxu0
    %v831 = vadd.f32 %v790, %v830
    %v832 = vpop.f32.mrf.mxu0
    %v833 = vadd.f32 %v792, %v832
    %v834 = vpop.f32.mrf.mxu0
    %v835 = vpop.f32.mrf.mxu0
    %836 = vdwg.mxu0
    %v837 = vmax.f32 %v831, 0.0
    %v838 = vmax.f32 %v833, 0.0
    %v839 = vpack.c.bf16 %v837, %v837
    %v840 = vpack.c.bf16 %v838, %v838
    %v841 = vld [vmem:[#allocation2] sm:$0xf]
    %v842 = vld [vmem:[#allocation2 + $0x4] sm:$0xf]
    %v843 = vld [vmem:[#allocation2 + $0x8] sm:$0xf]
    %v844 = vld [vmem:[#allocation2 + $0xc] sm:$0xf]
    %v845 = vld [vmem:[#allocation2 + $0x10] sm:$0xf]
    %v846 = vld [vmem:[#allocation2 + $0x14] sm:$0xf]
    %v847 = vld [vmem:[#allocation2 + $0x18] sm:$0xf]
    %v848 = vld [vmem:[#allocation2 + $0x1c] sm:$0xf]
    %v849 = vld [vmem:[#allocation2 + $0x20] sm:$0xf]
    %v850 = vld [vmem:[#allocation2 + $0x24] sm:$0xf]
    %v851 = vld [vmem:[#allocation2 + $0x28] sm:$0xf]
    %v852 = vld [vmem:[#allocation2 + $0x2c] sm:$0xf]
    %v853 = vld [vmem:[#allocation2 + $0x30] sm:$0xf]
    %v854 = vld [vmem:[#allocation2 + $0x34] sm:$0xf]
    %v855 = vld [vmem:[#allocation2 + $0x38] sm:$0xf]
    %v856 = vld [vmem:[#allocation2 + $0x3c] sm:$0xf]
    %v857 = vld [vmem:[#allocation2 + $0x40] sm:$0xf]
    %v858 = vld [vmem:[#allocation2 + $0x44] sm:$0xf]
    %v859 = vld [vmem:[#allocation2 + $0x48] sm:$0xf]
    %v860 = vld [vmem:[#allocation2 + $0x4c] sm:$0xf]
    %v861 = vld [vmem:[#allocation2 + $0x50] sm:$0xf]
    %v862 = vld [vmem:[#allocation2 + $0x54] sm:$0xf]
    %v863 = vld [vmem:[#allocation2 + $0x58] sm:$0xf]
    %v864 = vld [vmem:[#allocation2 + $0x5c] sm:$0xf]
    %v865 = vld [vmem:[#allocation2 + $0x60] sm:$0xf]
    %v866 = vld [vmem:[#allocation2 + $0x64] sm:$0xf]
    %v867 = vld [vmem:[#allocation2 + $0x68] sm:$0xf]
    %v868 = vld [vmem:[#allocation2 + $0x6c] sm:$0xf]
    %v869 = vld [vmem:[#allocation2 + $0x70] sm:$0xf]
    %v870 = vld [vmem:[#allocation2 + $0x74] sm:$0xf]
    %v871 = vld [vmem:[#allocation2 + $0x78] sm:$0xf]
    %v872 = vld [vmem:[#allocation2 + $0x7c] sm:$0xf]
    %v873 = vld [vmem:[%s4] sm:$0x1]
    %v875 = vlaneseq
    %v876 = vshrl.u32 %v875, 7
    %v877 = vsub.s32 0, %v876
    %v878 = vrot.slane %v873, %v877
    %v912 = vunpack.c.l.b16 %v841
    %v913 = vunpack.c.l.b16 %v842
    %v914 = vunpack.c.l.b16 %v843
    %v915 = vunpack.c.l.b16 %v844
    %v916 = vunpack.c.l.b16 %v845
    %v917 = vunpack.c.l.b16 %v846
    %v918 = vunpack.c.l.b16 %v847
    %v919 = vunpack.c.l.b16 %v848
    %v920 = vunpack.c.l.b16 %v849
    %v921 = vunpack.c.l.b16 %v850
    %v922 = vunpack.c.l.b16 %v851
    %v923 = vunpack.c.l.b16 %v852
    %v924 = vunpack.c.l.b16 %v853
    %v925 = vunpack.c.l.b16 %v854
    %v926 = vunpack.c.l.b16 %v855
    %v927 = vunpack.c.l.b16 %v856
    %v928 = vunpack.c.l.b16 %v857
    %v929 = vunpack.c.l.b16 %v858
    %v930 = vunpack.c.l.b16 %v859
    %v931 = vunpack.c.l.b16 %v860
    %v932 = vunpack.c.l.b16 %v861
    %v933 = vunpack.c.l.b16 %v862
    %v934 = vunpack.c.l.b16 %v863
    %v935 = vunpack.c.l.b16 %v864
    %v936 = vunpack.c.l.b16 %v865
    %v937 = vunpack.c.l.b16 %v866
    %v938 = vunpack.c.l.b16 %v867
    %v939 = vunpack.c.l.b16 %v868
    %v940 = vunpack.c.l.b16 %v869
    %v941 = vunpack.c.l.b16 %v870
    %v942 = vunpack.c.l.b16 %v871
    %v943 = vunpack.c.l.b16 %v872
    %v944 = vpack.c.b16 %v913, %v912
    %v945 = vpack.c.b16 %v915, %v914
    %v946 = vpack.c.b16 %v917, %v916
    %v947 = vpack.c.b16 %v919, %v918
    %v948 = vpack.c.b16 %v921, %v920
    %v949 = vpack.c.b16 %v923, %v922
    %v950 = vpack.c.b16 %v925, %v924
    %v951 = vpack.c.b16 %v927, %v926
    %v952 = vpack.c.b16 %v929, %v928
    %v953 = vpack.c.b16 %v931, %v930
    %v954 = vpack.c.b16 %v933, %v932
    %v955 = vpack.c.b16 %v935, %v934
    %v956 = vpack.c.b16 %v937, %v936
    %v957 = vpack.c.b16 %v939, %v938
    %v958 = vpack.c.b16 %v941, %v940
    %v959 = vpack.c.b16 %v943, %v942
    %976 = vmatprep.subr.bf16.mxu0 0
    %977 = vmatpush1.bf16.msra.mxu0 %v951
    %978 = vmatprep.subr.bf16.mxu0 0
    %979 = vmatpush1.bf16.msra.mxu0 %v950
    %980 = vmatprep.subr.bf16.mxu0 0
    %981 = vmatpush1.bf16.msra.mxu0 %v949
    %982 = vmatprep.subr.bf16.mxu0 0
    %983 = vmatpush1.bf16.msra.mxu0 %v948
    %984 = vmatprep.subr.bf16.mxu0 0
    %985 = vmatpush1.bf16.msra.mxu0 %v947
    %986 = vmatprep.subr.bf16.mxu0 0
    %987 = vmatpush1.bf16.msra.mxu0 %v946
    %988 = vmatprep.subr.bf16.mxu0 0
    %989 = vmatpush1.bf16.msra.mxu0 %v945
    %990 = vmatprep.subr.bf16.mxu0 0
    %991 = vmatpush1.bf16.msra.mxu0 %v944
    %992 = vmatprep.subr.bf16.mxu0 0
    %993 = vmatpush2.bf16.msra.mxu0 %v959
    %994 = vmatprep.subr.bf16.mxu0 0
    %995 = vmatpush2.bf16.msra.mxu0 %v958
    %996 = vmatprep.subr.bf16.mxu0 0
    %997 = vmatpush2.bf16.msra.mxu0 %v957
    %998 = vmatprep.subr.bf16.mxu0 0
    %999 = vmatpush2.bf16.msra.mxu0 %v956
    %1000 = vmatprep.subr.bf16.mxu0 0
    %1001 = vmatpush2.bf16.msra.mxu0 %v955
    %1002 = vmatprep.subr.bf16.mxu0 0
    %1003 = vmatpush2.bf16.msra.mxu0 %v954
    %1004 = vmatprep.subr.bf16.mxu0 0
    %1005 = vmatpush2.bf16.msra.mxu0 %v953
    %1006 = vmatprep.subr.bf16.mxu0 0
    %1007 = vmatpush2.bf16.msra.mxu0 %v952
    %1008 = vmatprep.mubr.bf16.mxu0 %v840
    %1009 = vmatmul.mubr.bf16.gmra.mxu0 %v839
    %v1010 = vpop.f32.mrf.mxu0
    %v1011 = vadd.f32 %v878, %v1010
    %v1012 = vpop.f32.mrf.mxu0
    %v1013 = vpop.f32.mrf.mxu0
    %v1014 = vpop.f32.mrf.mxu0
    %1015 = vdwg.mxu0
    %v1016 = vmax.f32 %v1011, 0.0
    %v1017 = vpack.c.bf16 %v1016, %v1016
    %v1018 = vld [vmem:[#allocation4] sm:$0xf]
    %v1019 = vld [vmem:[#allocation4 + $0x4] sm:$0xf]
    %v1020 = vld [vmem:[#allocation4 + $0x8] sm:$0xf]
    %v1021 = vld [vmem:[#allocation4 + $0xc] sm:$0xf]
    %v1022 = vld [vmem:[#allocation4 + $0x10] sm:$0xf]
    %v1023 = vld [vmem:[#allocation4 + $0x14] sm:$0xf]
    %v1024 = vld [vmem:[#allocation4 + $0x18] sm:$0xf]
    %v1025 = vld [vmem:[#allocation4 + $0x1c] sm:$0xf]
    %v1026 = vld [vmem:[#allocation4 + $0x20] sm:$0xf]
    %v1027 = vld [vmem:[#allocation4 + $0x24] sm:$0xf]
    %v1028 = vld [vmem:[#allocation4 + $0x28] sm:$0xf]
    %v1029 = vld [vmem:[#allocation4 + $0x2c] sm:$0xf]
    %v1030 = vld [vmem:[#allocation4 + $0x30] sm:$0xf]
    %v1031 = vld [vmem:[#allocation4 + $0x34] sm:$0xf]
    %v1032 = vld [vmem:[#allocation4 + $0x38] sm:$0xf]
    %v1033 = vld [vmem:[#allocation4 + $0x3c] sm:$0xf]
    %v1034 = vld [vmem:[%s6] sm:$0x1]
    %v1036 = vlaneseq
    %v1037 = vshrl.u32 %v1036, 7
    %v1038 = vsub.s32 0, %v1037
    %v1039 = vrot.slane %v1034, %v1038
    %v1057 = vunpack.c.l.b16 %v1018
    %v1058 = vunpack.c.l.b16 %v1019
    %v1059 = vunpack.c.l.b16 %v1020
    %v1060 = vunpack.c.l.b16 %v1021
    %v1061 = vunpack.c.l.b16 %v1022
    %v1062 = vunpack.c.l.b16 %v1023
    %v1063 = vunpack.c.l.b16 %v1024
    %v1064 = vunpack.c.l.b16 %v1025
    %v1065 = vunpack.c.l.b16 %v1026
    %v1066 = vunpack.c.l.b16 %v1027
    %v1067 = vunpack.c.l.b16 %v1028
    %v1068 = vunpack.c.l.b16 %v1029
    %v1069 = vunpack.c.l.b16 %v1030
    %v1070 = vunpack.c.l.b16 %v1031
    %v1071 = vunpack.c.l.b16 %v1032
    %v1072 = vunpack.c.l.b16 %v1033
    %v1073 = vpack.c.b16 %v1058, %v1057
    %v1074 = vpack.c.b16 %v1060, %v1059
    %v1075 = vpack.c.b16 %v1062, %v1061
    %v1076 = vpack.c.b16 %v1064, %v1063
    %v1077 = vpack.c.b16 %v1066, %v1065
    %v1078 = vpack.c.b16 %v1068, %v1067
    %v1079 = vpack.c.b16 %v1070, %v1069
    %v1080 = vpack.c.b16 %v1072, %v1071
    %1089 = vmatprep.subr.bf16.mxu0 0
    %1090 = vmatpush1.bf16.msra.mxu0 %v1080
    %1091 = vmatprep.subr.bf16.mxu0 0
    %1092 = vmatpush1.bf16.msra.mxu0 %v1079
    %1093 = vmatprep.subr.bf16.mxu0 0
    %1094 = vmatpush1.bf16.msra.mxu0 %v1078
    %1095 = vmatprep.subr.bf16.mxu0 0
    %1096 = vmatpush1.bf16.msra.mxu0 %v1077
    %1097 = vmatprep.subr.bf16.mxu0 0
    %1098 = vmatpush1.bf16.msra.mxu0 %v1076
    %1099 = vmatprep.subr.bf16.mxu0 0
    %1100 = vmatpush1.bf16.msra.mxu0 %v1075
    %1101 = vmatprep.subr.bf16.mxu0 0
    %1102 = vmatpush1.bf16.msra.mxu0 %v1074
    %1103 = vmatprep.subr.bf16.mxu0 0
    %1104 = vmatpush1.bf16.msra.mxu0 %v1073
    %1105 = vmatprep.subr.bf16.mxu0 0
    %1106 = vmatpush2.bf16.msra.mxu0 0
    %1107 = vmatprep.subr.bf16.mxu0 0
    %1108 = vmatpush2.bf16.msra.mxu0 0
    %1109 = vmatprep.subr.bf16.mxu0 0
    %1110 = vmatpush2.bf16.msra.mxu0 0
    %1111 = vmatprep.subr.bf16.mxu0 0
    %1112 = vmatpush2.bf16.msra.mxu0 0
    %1113 = vmatprep.subr.bf16.mxu0 0
    %1114 = vmatpush2.bf16.msra.mxu0 0
    %1115 = vmatprep.subr.bf16.mxu0 0
    %1116 = vmatpush2.bf16.msra.mxu0 0
    %1117 = vmatprep.subr.bf16.mxu0 0
    %1118 = vmatpush2.bf16.msra.mxu0 0
    %1119 = vmatprep.subr.bf16.mxu0 0
    %1120 = vmatpush2.bf16.msra.mxu0 0
    %1121 = vmatprep.mubr.bf16.mxu0 0
    %1122 = vmatmul.mubr.bf16.gmra.mxu0 %v1017
    %v1123 = vpop.f32.mrf.mxu0
    %v1124 = vadd.f32 %v1039, %v1123
    %v1125 = vpop.f32.mrf.mxu0
    %v1126 = vpop.f32.mrf.mxu0
    %v1127 = vpop.f32.mrf.mxu0
    %1128 = vdwg.mxu0
    %v1129 = vpack.c.bf16 %v1124, %v1124
    %1130 = vst [vmem:[%s7] sm:$0xf] %v1129
    // Predicated region
    $region38: #{simple_mlp_forward.1} parent=1 // pred_check
      _
    $region39: #{simple_mlp_forward.1} parent=1 // pred_check_branch
      %1132 = sbr.rel (0) target = $region41
    $region40: #{simple_mlp_forward.1} parent=1 // pred_region
      _
    $region41: #{simple_mlp_forward.1} parent=1 // pred_fallthru
      _
    // Predicated region
    $region42: #{simple_mlp_forward.1} parent=1 // pred_check
      _
    $region43: #{simple_mlp_forward.1} parent=1 // pred_check_branch
      %1134 = sbr.rel (0) target = $region45
    $region44: #{simple_mlp_forward.1} parent=1 // pred_region
      _
    $region45: #{simple_mlp_forward.1} parent=1 // pred_fallthru
      _
    %1135 = vsyncpa [#allocation3], 1
    %1136 = vsyncpa [#allocation5], 1

</llo_original>
